<compile_context>
chip_gen: v7x
topology: tpu7x:2x2x1
jax: 0.10.0
libtpu: 0.0.40
codegen_flags: <defaults>
</compile_context>

<pallas_src>
import math
import functools

import jax
import jax.numpy as jnp
from jax.experimental import pallas as pl
from jax.experimental.pallas import tpu as pltpu


def _flash_core_attention_kernel(q_ref, k_ref, v_ref, mask_ref, o_ref,
                                 m_ref, l_ref, acc_ref, *, scale):
    # q_ref: (1, G, tq, hn), k_ref/v_ref: (1, G, tk, hn), mask_ref: (1, tq, tk) int8
    # scratch: m_ref/l_ref (G, tq, 1) f32, acc_ref (G, tq, hn) f32
    ki = pl.program_id(3)
    nk = pl.num_programs(3)

    @pl.when(ki == 0)
    def _init():
        m_ref[...] = jnp.full_like(m_ref, -jnp.inf)
        l_ref[...] = jnp.zeros_like(l_ref)
        acc_ref[...] = jnp.zeros_like(acc_ref)

    # Fold the QK scale into Q once per grid step (G*tq*hn muls instead of G*tq*tk).
    q = q_ref[0] * scale                           # (G, tq, hn), stays in input dtype
    k = k_ref[0]                                   # (G, tk, hn)
    v = v_ref[0]                                   # (G, tk, hn)
    # Hoisted mask test: single int8 compare, no f32 cast, shared across the G heads.
    masked = mask_ref[0] != 0                      # (tq, tk) bool; True == mask out

    # Batched QK^T over the G heads (contraction on last dims, no transpose).
    s = jnp.einsum('gqd,gkd->gqk', q, k,
                   preferred_element_type=jnp.float32)        # (G, tq, tk) f32
    # FusedScaleMaskSoftmax semantics: masked positions filled with exactly -10000.
    s = jnp.where(masked[None, :, :], jnp.float32(-10000.0), s)

    m_prev = m_ref[...]                                        # (G, tq, 1)
    m_new = jnp.maximum(m_prev, jnp.max(s, axis=-1, keepdims=True))
    alpha = jnp.exp(m_prev - m_new)
    p = jnp.exp(s - m_new)                                     # (G, tq, tk)
    l_ref[...] = alpha * l_ref[...] + jnp.sum(p, axis=-1, keepdims=True)
    acc_ref[...] = alpha * acc_ref[...] + jnp.einsum(
        'gqk,gkd->gqd', p.astype(v.dtype), v,
        preferred_element_type=jnp.float32)                    # (G, tq, hn)
    m_ref[...] = m_new

    @pl.when(ki == nk - 1)
    def _finalize():
        # TODO(synk): attention_dropout is identity here (p = 0.0 / eval mode).
        inv_l = pl.reciprocal(l_ref[...], approx=True)         # (G, tq, 1)
        o_ref[0] = (acc_ref[...] * inv_l).astype(o_ref.dtype)  # direct store, no concat


def _pick_head_group(num_heads, head_dim, target_lane=256):
    """Largest divisor G of num_heads with G*head_dim <= target_lane (>= 1).
    Keeps score temporaries / VMEM bounded while sharing the mask across G heads."""
    best = 1
    for g in range(1, num_heads + 1):
        if num_heads % g == 0 and g * head_dim <= target_lane:
            best = g
    return best


def _pick_tile(dim, target, aligns):
    """Largest divisor of `dim` that is <= target and a multiple of one of `aligns`
    (tried in order); if dim <= target (or nothing matches) use the full dim (legal)."""
    if dim <= target:
        return dim
    for align in aligns:
        start = target - (target % align)
        for t in range(start, 0, -align):
            if dim % t == 0:
                return t
    # TODO(synk): odd/prime seq lengths fall back to the full dim; pad in the wrapper if
    # this ever exceeds the VMEM budget (typical GPT-3 seq lens are multiples of 128).
    return dim


def gpt3_core_attention(query_layer, key_layer, value_layer, attention_mask,
                        *, layer_number=1, apply_query_key_layer_scaling=True):
    """query/key/value: [s, b, np, hn]; attention_mask: [b, 1, sq, sk] (True == masked).
    Returns context in the module convention: [sq, b, np*hn]."""
    sq, b, nh, hn = query_layer.shape
    sk = key_layer.shape[0]

    coeff = float(max(1, layer_number)) if apply_query_key_layer_scaling else 1.0
    norm_factor = math.sqrt(hn) * (coeff if apply_query_key_layer_scaling else 1.0)
    scale = coeff / norm_factor            # folded QK scale ( == 1/sqrt(hn) )

    G = _pick_head_group(nh, hn)                       # heads per grid step
    tq = _pick_tile(sq, 1024, aligns=(32, 16, 8))      # big query tile -> fewer K/V/mask re-reads
    tk = _pick_tile(sk, 512, aligns=(128,))            # lane-aligned key tile

    # [s, b, nh, hn] -> [b, nh, s, hn]   (one XLA transpose; dtype preserved, no upcast)
    q_b = jnp.transpose(query_layer, (1, 2, 0, 3))
    k_b = jnp.transpose(key_layer, (1, 2, 0, 3))
    v_b = jnp.transpose(value_layer, (1, 2, 0, 3))
    # Mask: NOT broadcast over heads; int8 (4x smaller than int32 HBM stream).
    mask_b = attention_mask.reshape(b, sq, sk).astype(jnp.int8)

    kernel = functools.partial(_flash_core_attention_kernel, scale=scale)

    grid = (b, nh // G, sq // tq, sk // tk)

    ctx_b = pl.pallas_call(
        kernel,
        out_shape=jax.ShapeDtypeStruct((b, nh, sq, hn), query_layer.dtype),
        grid_spec=pltpu.PrefetchScalarGridSpec(
            num_scalar_prefetch=0,
            grid=grid,
            in_specs=[
                pl.BlockSpec((1, G, tq, hn), lambda bi, hg, qi, ki: (bi, hg, qi, 0)),
                pl.BlockSpec((1, G, tk, hn), lambda bi, hg, qi, ki: (bi, hg, ki, 0)),
                pl.BlockSpec((1, G, tk, hn), lambda bi, hg, qi, ki: (bi, hg, ki, 0)),
                # mask index_map ignores the head-group axis -> shared across heads
                pl.BlockSpec((1, tq, tk), lambda bi, hg, qi, ki: (bi, qi, ki)),
            ],
            out_specs=pl.BlockSpec((1, G, tq, hn),
                                   lambda bi, hg, qi, ki: (bi, hg, qi, 0)),
            scratch_shapes=[
                pltpu.VMEM((G, tq, 1), jnp.float32),    # running max m
                pltpu.VMEM((G, tq, 1), jnp.float32),    # running denom l
                pltpu.VMEM((G, tq, hn), jnp.float32),   # running context acc
            ]),
        compiler_params=pltpu.CompilerParams(
            dimension_semantics=("parallel", "parallel", "parallel", "arbitrary"),
            vmem_limit_bytes=48 * 1024 * 1024),         # fits the 64 MiB v7x cap w/ headroom
    )(q_b, k_b, v_b, mask_b)

    # [b, nh, sq, hn] -> [sq, b, nh*hn]  (module output convention)
    return jnp.transpose(ctx_b, (2, 0, 1, 3)).reshape(sq, b, nh * hn)


def _reference(query_layer, key_layer, value_layer, attention_mask, *, layer_number=1):
    sq, b, nh, hn = query_layer.shape
    sk = key_layer.shape[0]
    coeff = float(max(1, layer_number))
    norm_factor = math.sqrt(hn) * coeff
    q = jnp.transpose(query_layer, (1, 2, 0, 3)).astype(jnp.float32)
    k = jnp.transpose(key_layer, (1, 2, 0, 3)).astype(jnp.float32)
    v = jnp.transpose(value_layer, (1, 2, 0, 3)).astype(jnp.float32)
    scores = jnp.einsum("bnqd,bnkd->bnqk", q, k) / norm_factor
    scores = scores * coeff
    scores = jnp.where(jnp.broadcast_to(attention_mask, (b, nh, sq, sk)),
                       -10000.0, scores)
    probs = jax.nn.softmax(scores, axis=-1)
    ctx = jnp.einsum("bnqk,bnkd->bnqd", probs, v)
    ctx = jnp.transpose(ctx, (2, 0, 1, 3)).reshape(sq, b, nh * hn)
    return ctx.astype(query_layer.dtype)


if __name__ == "__main__":
    # small config consistent with the module:
    #   seq = 8, batch = 2, num_heads = 4, head_dim (kv_channels) = 32
    sq = sk = 8
    b, nh, hn = 2, 4, 32
    layer_number = 3

    key = jax.random.PRNGKey(0)
    kq, kk, kv = jax.random.split(key, 3)
    q = jax.random.normal(kq, (sq, b, nh, hn), dtype=jnp.float32)
    k = jax.random.normal(kk, (sk, b, nh, hn), dtype=jnp.float32)
    v = jax.random.normal(kv, (sk, b, nh, hn), dtype=jnp.float32)

    # causal padding-style mask: True means masked out
    causal = ~jnp.tril(jnp.ones((sq, sk), dtype=jnp.bool_))
    attention_mask = jnp.broadcast_to(causal[None, None], (b, 1, sq, sk))

    out = gpt3_core_attention(q, k, v, attention_mask,
                              layer_number=layer_number,
                              apply_query_key_layer_scaling=True)
    out = jax.block_until_ready(out)

    ref = _reference(q, k, v, attention_mask, layer_number=layer_number)
    assert out.shape == (sq, b, nh * hn), out.shape
    assert jnp.allclose(out, ref, atol=1e-2, rtol=1e-2), "mismatch vs reference"

    print("KERNEL_OK")
</pallas_src>

<mosaic_0001>
module attributes {stable_mosaic.version = 11 : i64} {
  func.func @_flash_core_attention_kernel(%arg0: i32, %arg1: i32, %arg2: i32, %arg3: i32, %arg4: memref<1x4x8x32xf32, #tpu.memory_space<vmem>>, %arg5: memref<1x4x8x32xf32, #tpu.memory_space<vmem>>, %arg6: memref<1x4x8x32xf32, #tpu.memory_space<vmem>>, %arg7: memref<1x8x8xi8, #tpu.memory_space<vmem>>, %arg8: memref<1x4x8x32xf32, #tpu.memory_space<vmem>>, %arg9: memref<4x8x1xf32, #tpu.memory_space<vmem>>, %arg10: memref<4x8x1xf32, #tpu.memory_space<vmem>>, %arg11: memref<4x8x32xf32, #tpu.memory_space<vmem>>) attributes {dimension_semantics = [#tpu.dimension_semantics<parallel>, #tpu.dimension_semantics<parallel>, #tpu.dimension_semantics<parallel>, #tpu.dimension_semantics<arbitrary>], iteration_bounds = array<i64: 2, 1, 1, 1>, scalar_prefetch = 0 : i64, scratch_operands = 3 : i64, tpu.core_type = #tpu.core_type<tc>, window_params = [{transform_indices = @transform_0, window_bounds = array<i64: 1, 4, 8, 32>}, {transform_indices = @transform_1, window_bounds = array<i64: 1, 4, 8, 32>}, {transform_indices = @transform_2, window_bounds = array<i64: 1, 4, 8, 32>}, {transform_indices = @transform_3, window_bounds = array<i64: 1, 8, 8>}, {transform_indices = @transform_4, window_bounds = array<i64: 1, 4, 8, 32>}]} {
    %c0_i32 = arith.constant 0 : i32
    %0 = arith.cmpi eq, %arg3, %c0_i32 : i32
    %1 = arith.extui %0 : i1 to i32
    %c0_i32_0 = arith.constant 0 : i32
    %2 = arith.cmpi ne, %1, %c0_i32_0 : i32
    scf.if %2 {
      %cst_40 = arith.constant 0xFF800000 : f32
      %46 = vector.broadcast %cst_40 : f32 to vector<4x8x1xf32>
      %c0_41 = arith.constant 0 : index
      %c0_42 = arith.constant 0 : index
      %c0_43 = arith.constant 0 : index
      %47 = vector.load %arg9[%c0_41, %c0_42, %c0_43] : memref<4x8x1xf32, #tpu.memory_space<vmem>>, vector<4x8x1xf32>
      tpu.vector_store %arg9[%c0_41, %c0_42, %c0_43], %46 {strides = array<i32>} : memref<4x8x1xf32, #tpu.memory_space<vmem>>, vector<4x8x1xf32>,
      %cst_44 = arith.constant 0.000000e+00 : f32
      %48 = vector.broadcast %cst_44 : f32 to vector<4x8x1xf32>
      %c0_45 = arith.constant 0 : index
      %c0_46 = arith.constant 0 : index
      %c0_47 = arith.constant 0 : index
      %49 = vector.load %arg10[%c0_45, %c0_46, %c0_47] : memref<4x8x1xf32, #tpu.memory_space<vmem>>, vector<4x8x1xf32>
      tpu.vector_store %arg10[%c0_45, %c0_46, %c0_47], %48 {strides = array<i32>} : memref<4x8x1xf32, #tpu.memory_space<vmem>>, vector<4x8x1xf32>,
      %cst_48 = arith.constant 0.000000e+00 : f32
      %50 = vector.broadcast %cst_48 : f32 to vector<4x8x32xf32>
      %c0_49 = arith.constant 0 : index
      %c0_50 = arith.constant 0 : index
      %c0_51 = arith.constant 0 : index
      %51 = vector.load %arg11[%c0_49, %c0_50, %c0_51] : memref<4x8x32xf32, #tpu.memory_space<vmem>>, vector<4x8x32xf32>
      tpu.vector_store %arg11[%c0_49, %c0_50, %c0_51], %50 {strides = array<i32>} : memref<4x8x32xf32, #tpu.memory_space<vmem>>, vector<4x8x32xf32>,
    } else {
    }
    %c0 = arith.constant 0 : index
    %c0_1 = arith.constant 0 : index
    %c0_2 = arith.constant 0 : index
    %c0_3 = arith.constant 0 : index
    %3 = vector.load %arg4[%c0, %c0_1, %c0_2, %c0_3] : memref<1x4x8x32xf32, #tpu.memory_space<vmem>>, vector<1x4x8x32xf32>
    %4 = vector.shape_cast %3 : vector<1x4x8x32xf32> to vector<4x8x32xf32>
    %cst = arith.constant 0.176776692 : f32
    %5 = vector.broadcast %cst : f32 to vector<4x8x32xf32>
    %6 = arith.mulf %4, %5 : vector<4x8x32xf32>
    %c0_4 = arith.constant 0 : index
    %c0_5 = arith.constant 0 : index
    %c0_6 = arith.constant 0 : index
    %c0_7 = arith.constant 0 : index
    %7 = vector.load %arg5[%c0_4, %c0_5, %c0_6, %c0_7] : memref<1x4x8x32xf32, #tpu.memory_space<vmem>>, vector<1x4x8x32xf32>
    %8 = vector.shape_cast %7 : vector<1x4x8x32xf32> to vector<4x8x32xf32>
    %c0_8 = arith.constant 0 : index
    %c0_9 = arith.constant 0 : index
    %c0_10 = arith.constant 0 : index
    %c0_11 = arith.constant 0 : index
    %9 = vector.load %arg6[%c0_8, %c0_9, %c0_10, %c0_11] : memref<1x4x8x32xf32, #tpu.memory_space<vmem>>, vector<1x4x8x32xf32>
    %10 = vector.shape_cast %9 : vector<1x4x8x32xf32> to vector<4x8x32xf32>
    %c0_12 = arith.constant 0 : index
    %c0_13 = arith.constant 0 : index
    %c0_14 = arith.constant 0 : index
    %11 = vector.load %arg7[%c0_12, %c0_13, %c0_14] : memref<1x8x8xi8, #tpu.memory_space<vmem>>, vector<1x8x8xi8>
    %12 = vector.shape_cast %11 : vector<1x8x8xi8> to vector<8x8xi8>
    %c0_i8 = arith.constant 0 : i8
    %13 = vector.broadcast %c0_i8 : i8 to vector<8x8xi8>
    %14 = arith.cmpi ne, %12, %13 : vector<8x8xi8>
    "tpu.trace_start"() <{level = 10 : i32, message = "gqd,gkd->gqk"}> : () -> ()
    %cst_15 = arith.constant dense<0.000000e+00> : vector<4x8x8xf32>
    %15 = tpu.matmul %6, %8, %cst_15 {dimension_numbers = #tpu.dot_dimension_numbers<[2], [2], [1], [1], [0, 0, 0, 1, 1, 1], [0], [0]>} : vector<4x8x32xf32>, vector<4x8x32xf32>, vector<4x8x8xf32> -> vector<4x8x8xf32>
    "tpu.trace_stop"() : () -> ()
    %16 = vector.shape_cast %14 : vector<8x8xi1> to vector<1x8x8xi1>
    %cst_16 = arith.constant -1.000000e+04 : f32
    %17 = vector.shape_cast %16 : vector<1x8x8xi1> to vector<1x8x8xi1>
    %18 = vector.broadcast %17 : vector<1x8x8xi1> to vector<4x8x8xi1>
    %19 = vector.broadcast %cst_16 : f32 to vector<4x8x8xf32>
    %20 = arith.select %18, %19, %15 : vector<4x8x8xi1>, vector<4x8x8xf32>
    %c0_17 = arith.constant 0 : index
    %c0_18 = arith.constant 0 : index
    %c0_19 = arith.constant 0 : index
    %21 = vector.load %arg9[%c0_17, %c0_18, %c0_19] : memref<4x8x1xf32, #tpu.memory_space<vmem>>, vector<4x8x1xf32>
    %cst_20 = arith.constant dense<0xFF800000> : vector<4x8xf32>
    %22 = vector.multi_reduction <maximumf>, %20, %cst_20 [2] : vector<4x8x8xf32> to vector<4x8xf32>
    %23 = vector.shape_cast %22 : vector<4x8xf32> to vector<4x8x1xf32>
    %24 = arith.maximumf %21, %23 : vector<4x8x1xf32>
    %25 = arith.subf %21, %24 : vector<4x8x1xf32>
    %26 = math.exp %25 : vector<4x8x1xf32>
    %27 = vector.broadcast %24 : vector<4x8x1xf32> to vector<4x8x8xf32>
    %28 = arith.subf %20, %27 : vector<4x8x8xf32>
    %29 = math.exp %28 : vector<4x8x8xf32>
    %c0_21 = arith.constant 0 : index
    %c0_22 = arith.constant 0 : index
    %c0_23 = arith.constant 0 : index
    %30 = vector.load %arg10[%c0_21, %c0_22, %c0_23] : memref<4x8x1xf32, #tpu.memory_space<vmem>>, vector<4x8x1xf32>
    %31 = arith.mulf %26, %30 : vector<4x8x1xf32>
    %cst_24 = arith.constant dense<0.000000e+00> : vector<4x8xf32>
    %32 = vector.multi_reduction <add>, %29, %cst_24 [2] : vector<4x8x8xf32> to vector<4x8xf32>
    %33 = vector.shape_cast %32 : vector<4x8xf32> to vector<4x8x1xf32>
    %34 = arith.addf %31, %33 : vector<4x8x1xf32>
    %c0_25 = arith.constant 0 : index
    %c0_26 = arith.constant 0 : index
    %c0_27 = arith.constant 0 : index
    %35 = vector.load %arg10[%c0_25, %c0_26, %c0_27] : memref<4x8x1xf32, #tpu.memory_space<vmem>>, vector<4x8x1xf32>
    tpu.vector_store %arg10[%c0_25, %c0_26, %c0_27], %34 {strides = array<i32>} : memref<4x8x1xf32, #tpu.memory_space<vmem>>, vector<4x8x1xf32>,
    %c0_28 = arith.constant 0 : index
    %c0_29 = arith.constant 0 : index
    %c0_30 = arith.constant 0 : index
    %36 = vector.load %arg11[%c0_28, %c0_29, %c0_30] : memref<4x8x32xf32, #tpu.memory_space<vmem>>, vector<4x8x32xf32>
    %37 = vector.broadcast %26 : vector<4x8x1xf32> to vector<4x8x32xf32>
    %38 = arith.mulf %37, %36 : vector<4x8x32xf32>
    "tpu.trace_start"() <{level = 10 : i32, message = "gqk,gkd->gqd"}> : () -> ()
    %cst_31 = arith.constant dense<0.000000e+00> : vector<4x8x32xf32>
    %39 = tpu.matmul %29, %10, %cst_31 {dimension_numbers = #tpu.dot_dimension_numbers<[2], [1], [1], [2], [0, 0, 0, 1, 1, 2], [0], [0]>} : vector<4x8x8xf32>, vector<4x8x32xf32>, vector<4x8x32xf32> -> vector<4x8x32xf32>
    "tpu.trace_stop"() : () -> ()
    %40 = arith.addf %38, %39 : vector<4x8x32xf32>
    %c0_32 = arith.constant 0 : index
    %c0_33 = arith.constant 0 : index
    %c0_34 = arith.constant 0 : index
    %41 = vector.load %arg11[%c0_32, %c0_33, %c0_34] : memref<4x8x32xf32, #tpu.memory_space<vmem>>, vector<4x8x32xf32>
    tpu.vector_store %arg11[%c0_32, %c0_33, %c0_34], %40 {strides = array<i32>} : memref<4x8x32xf32, #tpu.memory_space<vmem>>, vector<4x8x32xf32>,
    %c0_35 = arith.constant 0 : index
    %c0_36 = arith.constant 0 : index
    %c0_37 = arith.constant 0 : index
    %42 = vector.load %arg9[%c0_35, %c0_36, %c0_37] : memref<4x8x1xf32, #tpu.memory_space<vmem>>, vector<4x8x1xf32>
    tpu.vector_store %arg9[%c0_35, %c0_36, %c0_37], %24 {strides = array<i32>} : memref<4x8x1xf32, #tpu.memory_space<vmem>>, vector<4x8x1xf32>,
    %c0_i32_38 = arith.constant 0 : i32
    %43 = arith.cmpi eq, %arg3, %c0_i32_38 : i32
    %44 = arith.extui %43 : i1 to i32
    %c0_i32_39 = arith.constant 0 : i32
    %45 = arith.cmpi ne, %44, %c0_i32_39 : i32
    scf.if %45 {
      %c0_40 = arith.constant 0 : index
      %c0_41 = arith.constant 0 : index
      %c0_42 = arith.constant 0 : index
      %46 = vector.load %arg10[%c0_40, %c0_41, %c0_42] : memref<4x8x1xf32, #tpu.memory_space<vmem>>, vector<4x8x1xf32>
      %47 = tpu.reciprocal %46 {approx = true} : vector<4x8x1xf32> -> vector<4x8x1xf32>
      %c0_43 = arith.constant 0 : index
      %c0_44 = arith.constant 0 : index
      %c0_45 = arith.constant 0 : index
      %48 = vector.load %arg11[%c0_43, %c0_44, %c0_45] : memref<4x8x32xf32, #tpu.memory_space<vmem>>, vector<4x8x32xf32>
      %49 = vector.broadcast %47 : vector<4x8x1xf32> to vector<4x8x32xf32>
      %50 = arith.mulf %48, %49 : vector<4x8x32xf32>
      %c0_46 = arith.constant 0 : index
      %c0_47 = arith.constant 0 : index
      %c0_48 = arith.constant 0 : index
      %c0_49 = arith.constant 0 : index
      %51 = vector.load %arg8[%c0_46, %c0_47, %c0_48, %c0_49] : memref<1x4x8x32xf32, #tpu.memory_space<vmem>>, vector<1x4x8x32xf32>
      %52 = vector.shape_cast %51 : vector<1x4x8x32xf32> to vector<4x8x32xf32>
      %53 = vector.shape_cast %50 : vector<4x8x32xf32> to vector<1x4x8x32xf32>
      tpu.vector_store %arg8[%c0_46, %c0_47, %c0_48, %c0_49], %53 {strides = array<i32>} : memref<1x4x8x32xf32, #tpu.memory_space<vmem>>, vector<1x4x8x32xf32>,
    } else {
    }
    return
  }
  func.func @transform_0(%arg0: i32, %arg1: i32, %arg2: i32, %arg3: i32) -> (i32, i32, i32, i32) {
    %c0_i32 = arith.constant 0 : i32
    %c0_i32_0 = arith.constant 0 : i32
    return %arg0, %arg1, %arg2, %c0_i32 : i32, i32, i32, i32
  }
  func.func @transform_1(%arg0: i32, %arg1: i32, %arg2: i32, %arg3: i32) -> (i32, i32, i32, i32) {
    %c0_i32 = arith.constant 0 : i32
    %c0_i32_0 = arith.constant 0 : i32
    return %arg0, %arg1, %arg3, %c0_i32 : i32, i32, i32, i32
  }
  func.func @transform_2(%arg0: i32, %arg1: i32, %arg2: i32, %arg3: i32) -> (i32, i32, i32, i32) {
    %c0_i32 = arith.constant 0 : i32
    %c0_i32_0 = arith.constant 0 : i32
    return %arg0, %arg1, %arg3, %c0_i32 : i32, i32, i32, i32
  }
  func.func @transform_3(%arg0: i32, %arg1: i32, %arg2: i32, %arg3: i32) -> (i32, i32, i32) {
    %c0_i32 = arith.constant 0 : i32
    return %arg0, %arg2, %arg3 : i32, i32, i32
  }
  func.func @transform_4(%arg0: i32, %arg1: i32, %arg2: i32, %arg3: i32) -> (i32, i32, i32, i32) {
    %c0_i32 = arith.constant 0 : i32
    %c0_i32_0 = arith.constant 0 : i32
    return %arg0, %arg1, %arg2, %c0_i32 : i32, i32, i32, i32
  }
}

</mosaic_0001>

<llo_original>
// kernel: tpu_custom_call.1
$region0: #{tpu_custom_call.1}
  #allocation0 [shape = 'u32[]', space=smem, size = 0x4, offset = 0x4, fixed_abs, tag = 'smem constant byte address 0x4 - core index']
  #allocation1 [shape = 'u32[144,128]{1,0:T(1,128)}', space=vmem, size = 0x12000, scoped, tag = 'internal scratch']
  #allocation2 [shape = 'f32[4,8,1]{2,1,0:T(8,128)}', space=vmem, size = 0x4000, scoped, tag = 'scratch operand']
  #allocation3 [shape = 'f32[4,8,1]{2,1,0:T(8,128)}', space=vmem, size = 0x4000, scoped, tag = 'scratch operand']
  #allocation4 [shape = 'f32[4,8,32]{2,1,0:T(8,128)}', space=vmem, size = 0x4000, scoped, tag = 'scratch operand']
  %s0 = inlined_call_operand.hbm [shape: f32[2,4,8,32], index: 0, kind: input, shape index: {}]
  %s1 = inlined_call_operand.hbm [shape: f32[2,4,8,32], index: 1, kind: input, shape index: {}]
  %s2 = inlined_call_operand.hbm [shape: f32[2,4,8,32], index: 2, kind: input, shape index: {}]
  %s3 = inlined_call_operand.vmem [shape: s8[2,8,8], index: 3, kind: input, shape index: {}]
  %s4 = inlined_call_operand.hbm [shape: f32[2,4,8,32], index: 4, kind: output, shape index: {}]
  %s5 = sld [smem:[#allocation0]]
  $region69: #{tpu_custom_call.1} parent=0
    _
  %s7 = ssub.s32 1, %s5
  %s8 = scalar_select 0, %s7, %s5
  $region1: #{tpu_custom_call.1} parent=0
    #allocation5 [shape = 'u8[32768]{0}', space=vmem, size = 0x8000, scoped, tag = 'input window, operand 0']
    #allocation6 [shape = 's32[2]{0}', space=sflag, size = 0x8, scoped, tag = 'scoped memory for tpu_custom_call.1']
    #allocation7 [shape = 's32[2]{0}', space=sflag, size = 0x8, scoped, tag = 'scoped memory for tpu_custom_call.1']
    #allocation8 [shape = 'u8[32768]{0}', space=vmem, size = 0x8000, scoped, tag = 'input window, operand 1']
    #allocation9 [shape = 's32[2]{0}', space=sflag, size = 0x8, scoped, tag = 'scoped memory for tpu_custom_call.1']
    #allocation10 [shape = 'u8[32768]{0}', space=vmem, size = 0x8000, scoped, tag = 'input window, operand 2']
    #allocation11 [shape = 'u8[32768]{0}', space=vmem, size = 0x8000, scoped, tag = 'output window, operand 0']
    %9 = vsyncpa [#allocation6], 0
    %s10 = scalar_lea.sflag [#allocation6], 1
    %11 = vsyncpa %s10, 0
    %12 = vsyncpa [#allocation9], 0
    %s13 = scalar_lea.sflag [#allocation9], 1
    %14 = vsyncpa %s13, 0
    %15 = vsyncpa [#allocation7], 0
    %s16 = scalar_lea.sflag [#allocation7], 1
    %17 = vsyncpa %s16, 0
    loop: start=0, step=1, limit=4
    $region2: #{tpu_custom_call.1} parent=1 // loop_pre_header
      _
    $region3: #{tpu_custom_call.1} parent=1 // loop_header
      %s19 = sphi 0, %s23
      %p20 = scmp.ge.s32.totalorder %s19, 4
      %s26 = sphi 0, %s52
      %s27 = sphi 0, %s48
      %s28 = sphi 0, %s44
      %s29 = sphi 0, %s40
      %s30 = sphi 0, %s26
      %s31 = sphi 0, %s27
      %s32 = sphi 0, %s28
      %s33 = sphi 0, %s29
      %s34 = sphi 0, %s30
      %s35 = sphi 0, %s31
      %s36 = sphi 0, %s32
      %s37 = sphi 0, %s33
      %s59 = sphi 0, %s61
      %s62 = sphi 0, %s59
      %s63 = sphi 0, %s62
      %s79 = sphi 0, %s63
      %s89 = sphi 0, %s91
      %s92 = sphi 0, %s89
      %s93 = sphi 0, %s92
      %s109 = sphi 0, %s93
      %s119 = sphi 0, %s121
      %s122 = sphi 0, %s119
      %s123 = sphi 0, %s122
      %s139 = sphi 0, %s123
      %s149 = sphi 0, %s151
      %s152 = sphi 0, %s149
      %s153 = sphi 0, %s152
      %s169 = sphi 0, %s153
      %s179 = sphi 0, %s181
      %s182 = sphi 0, %s179
      %s183 = sphi 0, %s182
      %s199 = sphi 0, %s183
    $region4: #{tpu_custom_call.1} parent=1 // loop_header_branch
      %22 = sbr.rel (%p20) target = $region8
    $region5: #{tpu_custom_call.1} parent=1 // loop_body
      %s24 = ssub.s32 %s19, 1
      %s25 = ssub.s32 %s19, 2
      %s38 = sadd.s32 1, %s29
      %p39 = scmp.ge.s32.totalorder %s38, 1
      %s40 = scalar_select %p39, 0, %s38
      %s41 = sadd.s32 1, %s28
      %s42 = scalar_select %p39, %s41, %s28
      %p43 = scmp.ge.s32.totalorder %s42, 1
      %s44 = scalar_select %p43, 0, %s42
      %s45 = sadd.s32 1, %s27
      %s46 = scalar_select %p43, %s45, %s27
      %p47 = scmp.ge.s32.totalorder %s46, 1
      %s48 = scalar_select %p47, 0, %s46
      %s49 = sadd.s32 1, %s26
      %s50 = scalar_select %p47, %s49, %s26
      %p51 = scmp.ge.s32.totalorder %s50, 2
      %s52 = scalar_select %p51, 0, %s50
      %s53 = ssub.s32 %s26, %s52
      %s54 = ssub.s32 %s27, %s48
      %s55 = sor.u32 %s53, %s54
      %s56 = ssub.s32 %s28, %s44
      %s57 = sor.u32 %s55, %s56
      %p58 = scmp.eq.s32.totalorder %s57, 0
      %s60 = sadd.s32 %s59, 1
      %s61 = scalar_select %p58, %s59, %s60
      %p64 = pneg %p58
      %p65 = scmp.eq.s32.totalorder %s19, 1
      %p66 = por %p64, %p65
      %p67 = scmp.ne.s32.totalorder %s59, %s62
      %p68 = scmp.eq.s32.totalorder %s19, 0
      %p69 = por %p67, %p68
      %p70 = scmp.ne.s32.totalorder %s59, %s62
      %p71 = scmp.eq.s32.totalorder %s24, 1
      %p72 = por %p70, %p71
      %p73 = scmp.ne.s32.totalorder %s62, %s63
      %p74 = scmp.eq.s32.totalorder %s24, 0
      %p75 = por %p73, %p74
      %p76 = scmp.ne.s32.totalorder %s62, %s63
      %p77 = scmp.eq.s32.totalorder %s25, 1
      %p78 = por %p76, %p77
      %p80 = scmp.ne.s32.totalorder %s63, %s79
      %p81 = scmp.eq.s32.totalorder %s25, 0
      %p82 = por %p80, %p81
      %s83 = ssub.s32 %s26, %s52
      %s84 = ssub.s32 %s27, %s48
      %s85 = sor.u32 %s83, %s84
      %s86 = ssub.s32 %s29, %s40
      %s87 = sor.u32 %s85, %s86
      %p88 = scmp.eq.s32.totalorder %s87, 0
      %s90 = sadd.s32 %s89, 1
      %s91 = scalar_select %p88, %s89, %s90
      %p94 = pneg %p88
      %p95 = scmp.eq.s32.totalorder %s19, 1
      %p96 = por %p94, %p95
      %p97 = scmp.ne.s32.totalorder %s89, %s92
      %p98 = scmp.eq.s32.totalorder %s19, 0
      %p99 = por %p97, %p98
      %p100 = scmp.ne.s32.totalorder %s89, %s92
      %p101 = scmp.eq.s32.totalorder %s24, 1
      %p102 = por %p100, %p101
      %p103 = scmp.ne.s32.totalorder %s92, %s93
      %p104 = scmp.eq.s32.totalorder %s24, 0
      %p105 = por %p103, %p104
      %p106 = scmp.ne.s32.totalorder %s92, %s93
      %p107 = scmp.eq.s32.totalorder %s25, 1
      %p108 = por %p106, %p107
      %p110 = scmp.ne.s32.totalorder %s93, %s109
      %p111 = scmp.eq.s32.totalorder %s25, 0
      %p112 = por %p110, %p111
      %s113 = ssub.s32 %s26, %s52
      %s114 = ssub.s32 %s27, %s48
      %s115 = sor.u32 %s113, %s114
      %s116 = ssub.s32 %s29, %s40
      %s117 = sor.u32 %s115, %s116
      %p118 = scmp.eq.s32.totalorder %s117, 0
      %s120 = sadd.s32 %s119, 1
      %s121 = scalar_select %p118, %s119, %s120
      %p124 = pneg %p118
      %p125 = scmp.eq.s32.totalorder %s19, 1
      %p126 = por %p124, %p125
      %p127 = scmp.ne.s32.totalorder %s119, %s122
      %p128 = scmp.eq.s32.totalorder %s19, 0
      %p129 = por %p127, %p128
      %p130 = scmp.ne.s32.totalorder %s119, %s122
      %p131 = scmp.eq.s32.totalorder %s24, 1
      %p132 = por %p130, %p131
      %p133 = scmp.ne.s32.totalorder %s122, %s123
      %p134 = scmp.eq.s32.totalorder %s24, 0
      %p135 = por %p133, %p134
      %p136 = scmp.ne.s32.totalorder %s122, %s123
      %p137 = scmp.eq.s32.totalorder %s25, 1
      %p138 = por %p136, %p137
      %p140 = scmp.ne.s32.totalorder %s123, %s139
      %p141 = scmp.eq.s32.totalorder %s25, 0
      %p142 = por %p140, %p141
      %s143 = ssub.s32 %s26, %s52
      %s144 = ssub.s32 %s28, %s44
      %s145 = sor.u32 %s143, %s144
      %s146 = ssub.s32 %s29, %s40
      %s147 = sor.u32 %s145, %s146
      %p148 = scmp.eq.s32.totalorder %s147, 0
      %s150 = sadd.s32 %s149, 1
      %s151 = scalar_select %p148, %s149, %s150
      %p154 = pneg %p148
      %p155 = scmp.eq.s32.totalorder %s19, 1
      %p156 = por %p154, %p155
      %p157 = scmp.ne.s32.totalorder %s149, %s152
      %p158 = scmp.eq.s32.totalorder %s19, 0
      %p159 = por %p157, %p158
      %p160 = scmp.ne.s32.totalorder %s149, %s152
      %p161 = scmp.eq.s32.totalorder %s24, 1
      %p162 = por %p160, %p161
      %p163 = scmp.ne.s32.totalorder %s152, %s153
      %p164 = scmp.eq.s32.totalorder %s24, 0
      %p165 = por %p163, %p164
      %p166 = scmp.ne.s32.totalorder %s152, %s153
      %p167 = scmp.eq.s32.totalorder %s25, 1
      %p168 = por %p166, %p167
      %p170 = scmp.ne.s32.totalorder %s153, %s169
      %p171 = scmp.eq.s32.totalorder %s25, 0
      %p172 = por %p170, %p171
      %s173 = ssub.s32 %s26, %s52
      %s174 = ssub.s32 %s27, %s48
      %s175 = sor.u32 %s173, %s174
      %s176 = ssub.s32 %s28, %s44
      %s177 = sor.u32 %s175, %s176
      %p178 = scmp.eq.s32.totalorder %s177, 0
      %s180 = sadd.s32 %s179, 1
      %s181 = scalar_select %p178, %s179, %s180
      %p184 = pneg %p178
      %p185 = scmp.eq.s32.totalorder %s19, 1
      %p186 = por %p184, %p185
      %p187 = scmp.ne.s32.totalorder %s179, %s182
      %p188 = scmp.eq.s32.totalorder %s19, 0
      %p189 = por %p187, %p188
      %p190 = scmp.ne.s32.totalorder %s179, %s182
      %p191 = scmp.eq.s32.totalorder %s24, 1
      %p192 = por %p190, %p191
      %p193 = scmp.ne.s32.totalorder %s182, %s183
      %p194 = scmp.eq.s32.totalorder %s24, 0
      %p195 = por %p193, %p194
      %p196 = scmp.ne.s32.totalorder %s182, %s183
      %p197 = scmp.eq.s32.totalorder %s25, 1
      %p198 = por %p196, %p197
      %p200 = scmp.ne.s32.totalorder %s183, %s199
      %p201 = scmp.eq.s32.totalorder %s25, 0
      %p202 = por %p200, %p201
      %p203 = scmp.le.s32.totalorder 1, %s19
      %p204 = scmp.lt.s32.totalorder %s19, 3
      %p205 = pnand %p203, %p204
      %p206 = pneg %p205
      // Predicated region
      $region9: #{tpu_custom_call.1} parent=5 // pred_check
        _
      $region10: #{tpu_custom_call.1} parent=5 // pred_check_branch
        %208 = sbr.rel (%p205) target = $region12
      $region11: #{tpu_custom_call.1} parent=5 // pred_region
        %s209 = ssub.s32 %s19, 1
      $region12: #{tpu_custom_call.1} parent=5 // pred_fallthru
        _
      %p210 = scmp.lt.s32.totalorder %s19, 2
      // Predicated region
      $region13: #{tpu_custom_call.1} parent=5 // pred_check
        %p211 = pneg %p210
      $region14: #{tpu_custom_call.1} parent=5 // pred_check_branch
        %213 = sbr.rel (%p211) target = $region16
      $region15: #{tpu_custom_call.1} parent=5 // pred_region
        // Predicated region
        $region17: #{tpu_custom_call.1} parent=15 // pred_check
          %p214 = pneg %p69
        $region18: #{tpu_custom_call.1} parent=15 // pred_check_branch
          %216 = sbr.rel (%p214) target = $region20
        $region19: #{tpu_custom_call.1} parent=15 // pred_region
          %s217 = sand.u32 %s59, 1
          %s218 = scalar_lea.sflag [#allocation6], %s217
          %s219 = sand.u32 %s59, 1
          %s220 = smul.addr %s219, 32
          %s221 = scalar_lea.vmem [#allocation5], %s220
          %s222 = smul.u32 4, %s27
          %s224 = ssub.s32 512, 512
          %225 = vsyncadd %s218, %s224
          %s226 = sadd.s32 %s28, %s222
          %s227 = smul.addr %s26, 4
          %s228 = sadd.s32 %s226, %s227
          %s229 = smul.addr %s228, 128
          %s230 = scalar_lea.hbm %s0, %s229
          %s231 = sshll.u32 %s221, 4
          %s232 = int_to_ptr.vmem [resolvable:$true] %s231
          %237 = dma.hbm_to_vmem [thread:$0]  %s230, 512, %s232, %s218, 128, 128, 8
        $region20: #{tpu_custom_call.1} parent=15 // pred_fallthru
          _
        // Predicated region
        $region21: #{tpu_custom_call.1} parent=15 // pred_check
          %p238 = pneg %p99
        $region22: #{tpu_custom_call.1} parent=15 // pred_check_branch
          %240 = sbr.rel (%p238) target = $region24
        $region23: #{tpu_custom_call.1} parent=15 // pred_region
          %s241 = sand.u32 %s19, 1
          %s242 = scalar_lea.sflag [#allocation9], %s241
          %s243 = sand.u32 %s89, 1
          %s244 = smul.addr %s243, 32
          %s245 = scalar_lea.vmem [#allocation8], %s244
          %s246 = smul.u32 4, %s27
          %s248 = ssub.s32 512, 512
          %249 = vsyncadd %s242, %s248
          %s250 = sadd.s32 %s29, %s246
          %s251 = smul.addr %s26, 4
          %s252 = sadd.s32 %s250, %s251
          %s253 = smul.addr %s252, 128
          %s254 = scalar_lea.hbm %s1, %s253
          %s255 = sshll.u32 %s245, 4
          %s256 = int_to_ptr.vmem [resolvable:$true] %s255
          %261 = dma.hbm_to_vmem [thread:$0]  %s254, 512, %s256, %s242, 128, 128, 8
        $region24: #{tpu_custom_call.1} parent=15 // pred_fallthru
          _
        // Predicated region
        $region25: #{tpu_custom_call.1} parent=15 // pred_check
          %p262 = pneg %p129
        $region26: #{tpu_custom_call.1} parent=15 // pred_check_branch
          %264 = sbr.rel (%p262) target = $region28
        $region27: #{tpu_custom_call.1} parent=15 // pred_region
          %s265 = sand.u32 %s19, 1
          %s266 = scalar_lea.sflag [#allocation9], %s265
          %s267 = sand.u32 %s119, 1
          %s268 = smul.addr %s267, 32
          %s269 = scalar_lea.vmem [#allocation10], %s268
          %s270 = smul.u32 4, %s27
          %s272 = ssub.s32 512, 512
          %273 = vsyncadd %s266, %s272
          %s274 = sadd.s32 %s29, %s270
          %s275 = smul.addr %s26, 4
          %s276 = sadd.s32 %s274, %s275
          %s277 = smul.addr %s276, 128
          %s278 = scalar_lea.hbm %s2, %s277
          %s279 = sshll.u32 %s269, 4
          %s280 = int_to_ptr.vmem [resolvable:$true] %s279
          %285 = dma.hbm_to_vmem [thread:$0]  %s278, 512, %s280, %s266, 128, 128, 8
        $region28: #{tpu_custom_call.1} parent=15 // pred_fallthru
          _
        // Predicated region
        $region29: #{tpu_custom_call.1} parent=15 // pred_check
          %p286 = pneg %p159
        $region30: #{tpu_custom_call.1} parent=15 // pred_check_branch
          %288 = sbr.rel (%p286) target = $region32
        $region31: #{tpu_custom_call.1} parent=15 // pred_region
          %p289 = scmp.lt.s32.totalorder %s26, 1
          %s290 = scalar_select %p289, %s26, 1
          %p291 = scmp.lt.s32.totalorder %s28, 0
          %s292 = scalar_select %p291, %s28, 0
          %p293 = scmp.lt.s32.totalorder %s29, 0
          %s294 = scalar_select %p293, %s29, 0
          %s295 = sadd.s32 %s294, %s292
          %s296 = sadd.s32 %s295, %s290
          %s297 = smul.addr %s296, 2
          %s298 = scalar_lea.vmem %s3, %s297
        $region32: #{tpu_custom_call.1} parent=15 // pred_fallthru
          _
      $region16: #{tpu_custom_call.1} parent=5 // pred_fallthru
        _
      %p299 = scmp.le.s32.totalorder 1, %s19
      %p300 = scmp.lt.s32.totalorder %s19, 3
      %p301 = pnand %p299, %p300
      %p302 = pneg %p301
      // Predicated region
      $region33: #{tpu_custom_call.1} parent=5 // pred_check
        _
      $region34: #{tpu_custom_call.1} parent=5 // pred_check_branch
        %304 = sbr.rel (%p301) target = $region36
      $region35: #{tpu_custom_call.1} parent=5 // pred_region
        %s305 = ssub.s32 %s19, 1
        %s306 = sand.u32 %s62, 1
        %s307 = scalar_lea.sflag [#allocation6], %s306
        %s308 = sand.u32 %s62, 1
        %s309 = smul.addr %s308, 32
        %s310 = scalar_lea.vmem [#allocation5], %s309
        // Predicated region
        $region37: #{tpu_custom_call.1} parent=35 // pred_check
          %p311 = pneg %p75
        $region38: #{tpu_custom_call.1} parent=35 // pred_check_branch
          %313 = sbr.rel (%p311) target = $region40
        $region39: #{tpu_custom_call.1} parent=35 // pred_region
          %314 = dma.done %s307, 512
        $region40: #{tpu_custom_call.1} parent=35 // pred_fallthru
          _
        %s315 = sand.u32 %s24, 1
        %s316 = scalar_lea.sflag [#allocation9], %s315
        %s317 = sand.u32 %s92, 1
        %s318 = smul.addr %s317, 32
        %s319 = scalar_lea.vmem [#allocation8], %s318
        // Predicated region
        $region41: #{tpu_custom_call.1} parent=35 // pred_check
          %p320 = pneg %p105
        $region42: #{tpu_custom_call.1} parent=35 // pred_check_branch
          %322 = sbr.rel (%p320) target = $region44
        $region43: #{tpu_custom_call.1} parent=35 // pred_region
          %323 = dma.done %s316, 512
        $region44: #{tpu_custom_call.1} parent=35 // pred_fallthru
          _
        %s324 = sand.u32 %s24, 1
        %s325 = scalar_lea.sflag [#allocation9], %s324
        %s326 = sand.u32 %s122, 1
        %s327 = smul.addr %s326, 32
        %s328 = scalar_lea.vmem [#allocation10], %s327
        // Predicated region
        $region45: #{tpu_custom_call.1} parent=35 // pred_check
          %p329 = pneg %p135
        $region46: #{tpu_custom_call.1} parent=35 // pred_check_branch
          %331 = sbr.rel (%p329) target = $region48
        $region47: #{tpu_custom_call.1} parent=35 // pred_region
          %332 = dma.done %s325, 512
        $region48: #{tpu_custom_call.1} parent=35 // pred_fallthru
          _
        %s333 = sand.u32 %s62, 1
        %s334 = scalar_lea.sflag [#allocation6], %s333
        %s335 = sand.u32 %s62, 1
        %s336 = smul.addr %s335, 32
        %s337 = scalar_lea.vmem [#allocation5], %s336
        %p338 = pneg %p75
        %p339 = pneg %p72
        %s340 = sand.u32 %s24, 1
        %s341 = scalar_lea.sflag [#allocation9], %s340
        %s342 = sand.u32 %s92, 1
        %s343 = smul.addr %s342, 32
        %s344 = scalar_lea.vmem [#allocation8], %s343
        %p345 = pneg %p105
        %p346 = pneg %p102
        %s347 = sand.u32 %s24, 1
        %s348 = scalar_lea.sflag [#allocation9], %s347
        %s349 = sand.u32 %s122, 1
        %s350 = smul.addr %s349, 32
        %s351 = scalar_lea.vmem [#allocation10], %s350
        %p352 = pneg %p135
        %p353 = pneg %p132
        %p354 = scmp.lt.s32.totalorder %s30, 1
        %s355 = scalar_select %p354, %s30, 1
        %p356 = scmp.lt.s32.totalorder %s32, 0
        %s357 = scalar_select %p356, %s32, 0
        %p358 = scmp.lt.s32.totalorder %s33, 0
        %s359 = scalar_select %p358, %s33, 0
        %s360 = sadd.s32 %s359, %s357
        %s361 = sadd.s32 %s360, %s355
        %s362 = smul.addr %s361, 2
        %s363 = scalar_lea.vmem %s3, %s362
        %p364 = pneg %p165
        %p365 = pneg %p162
        %p366 = pneg %p195
        %p367 = pneg %p192
        %s368 = sand.u32 %s182, 1
        %s369 = scalar_lea.sflag [#allocation7], %s368
        %s370 = sand.u32 %s182, 1
        %s371 = smul.addr %s370, 32
        %s372 = scalar_lea.vmem [#allocation11], %s371
        %s373 = smul.u32 4, %s31
        %s374 = smul.u32 4, %s31
        %s375 = smul.u32 4, %s31
        %p376 = scmp.lt.s32.totalorder %s30, 1
        %s377 = scalar_select %p376, %s30, 1
        %p378 = scmp.lt.s32.totalorder %s32, 0
        %s379 = scalar_select %p378, %s32, 0
        %p380 = scmp.lt.s32.totalorder %s33, 0
        %s381 = scalar_select %p380, %s33, 0
        %s382 = sadd.s32 %s381, %s379
        %s383 = sadd.s32 %s382, %s377
        %s384 = smul.addr %s383, 2
        %s385 = scalar_lea.vmem %s3, %s384
        %s386 = smul.u32 4, %s31
        %p389 = scmp.eq.s32.totalorder %s33, 0
        // Predicated region
        $region49: #{tpu_custom_call.1} parent=35 // pred_check
          %p390 = pneg %p389
        $region50: #{tpu_custom_call.1} parent=35 // pred_check_branch
          %392 = sbr.rel (%p390) target = $region52
        $region51: #{tpu_custom_call.1} parent=35 // pred_region
          %vm393 = vcmask 7168
          %394 = vst.msk [vmem:[#allocation2] sm:$0xff] %vm393, -inf
          %395 = vst.msk [vmem:[#allocation2 + $0x8] sm:$0xff] %vm393, -inf
          %396 = vst.msk [vmem:[#allocation2 + $0x10] sm:$0xff] %vm393, -inf
          %397 = vst.msk [vmem:[#allocation2 + $0x18] sm:$0xff] %vm393, -inf
          %398 = vst.msk [vmem:[#allocation3] sm:$0xff] %vm393, 0.0
          %399 = vst.msk [vmem:[#allocation3 + $0x8] sm:$0xff] %vm393, 0.0
          %400 = vst.msk [vmem:[#allocation3 + $0x10] sm:$0xff] %vm393, 0.0
          %401 = vst.msk [vmem:[#allocation3 + $0x18] sm:$0xff] %vm393, 0.0
          %vm402 = vcmask 261120
          %403 = vst.msk [vmem:[#allocation4] sm:$0xff] %vm402, 0.0
          %404 = vst.msk [vmem:[#allocation4 + $0x8] sm:$0xff] %vm402, 0.0
          %405 = vst.msk [vmem:[#allocation4 + $0x10] sm:$0xff] %vm402, 0.0
          %406 = vst.msk [vmem:[#allocation4 + $0x18] sm:$0xff] %vm402, 0.0
        $region52: #{tpu_custom_call.1} parent=35 // pred_fallthru
          _
        %v407 = vld [vmem:[%s310] sm:$0xff]
        %v408 = vld [vmem:[%s310 + $0x8] sm:$0xff]
        %v409 = vld [vmem:[%s310 + $0x10] sm:$0xff]
        %v410 = vld [vmem:[%s310 + $0x18] sm:$0xff]
        %v411 = vmul.f32 %v407, 0.17677669
        %v412 = vmul.f32 %v408, 0.17677669
        %v413 = vmul.f32 %v409, 0.17677669
        %v414 = vmul.f32 %v410, 0.17677669
        %v415 = vld [vmem:[%s319] sm:$0xff]
        %v416 = vld [vmem:[%s319 + $0x8] sm:$0xff]
        %v417 = vld [vmem:[%s319 + $0x10] sm:$0xff]
        %v418 = vld [vmem:[%s319 + $0x18] sm:$0xff]
        %v419 = vld [vmem:[%s328] sm:$0xff]
        %v420 = vld [vmem:[%s328 + $0x8] sm:$0xff]
        %v421 = vld [vmem:[%s328 + $0x10] sm:$0xff]
        %v422 = vld [vmem:[%s328 + $0x18] sm:$0xff]
        %v423 = vld [vmem:[%s385] sm:$0x3]
        %vm424 = vnez %v423
        %vm425 = vcmask 261120
        %v427 = vsel %vm425, %v411, 0
        %v430 = vsel %vm425, %v415, 0
        %432 = vmatprep.subr.mxu0 0.0
        %433 = vmatpush1.xpose.msra.mxu0 %v430
        %434 = vmatprep.subr.mxu0 0.0
        %435 = vmatpush1.xpose.msra.mxu0 0.0
        %436 = vmatprep.subr.mxu0 0.0
        %437 = vmatpush1.xpose.msra.mxu0 0.0
        %438 = vmatprep.subr.mxu0 0.0
        %439 = vmatpush1.xpose.msra.mxu0 0.0
        %440 = vmatprep.subr.mxu0 0.0
        %441 = vmatpush1.xpose.msra.mxu0 0.0
        %442 = vmatprep.subr.mxu0 0.0
        %443 = vmatpush1.xpose.msra.mxu0 0.0
        %444 = vmatprep.subr.mxu0 0.0
        %445 = vmatpush1.xpose.msra.mxu0 0.0
        %446 = vmatprep.subr.mxu0 0.0
        %447 = vmatpush1.xpose.msra.mxu0 0.0
        %448 = vmatprep.subr.mxu0 0.0
        %449 = vmatpush1.xpose.msra.mxu0 0.0
        %450 = vmatprep.subr.mxu0 0.0
        %451 = vmatpush1.xpose.msra.mxu0 0.0
        %452 = vmatprep.subr.mxu0 0.0
        %453 = vmatpush1.xpose.msra.mxu0 0.0
        %454 = vmatprep.subr.mxu0 0.0
        %455 = vmatpush1.xpose.msra.mxu0 0.0
        %456 = vmatprep.subr.mxu0 0.0
        %457 = vmatpush1.xpose.msra.mxu0 0.0
        %458 = vmatprep.subr.mxu0 0.0
        %459 = vmatpush1.xpose.msra.mxu0 0.0
        %460 = vmatprep.subr.mxu0 0.0
        %461 = vmatpush1.xpose.msra.mxu0 0.0
        %462 = vmatprep.subr.mxu0 0.0
        %463 = vmatpush1.xpose.msra.mxu0 0.0
        %464 = vmatprep.subr.mxu0 0.0
        %465 = vmatpush1.xpose.msra.mxu0 0.0
        %466 = vmatprep.subr.mxu0 0.0
        %467 = vmatpush1.xpose.msra.mxu0 0.0
        %468 = vmatprep.subr.mxu0 0.0
        %469 = vmatpush1.xpose.msra.mxu0 0.0
        %470 = vmatprep.subr.mxu0 0.0
        %471 = vmatpush1.xpose.msra.mxu0 0.0
        %472 = vmatprep.subr.mxu0 0.0
        %473 = vmatpush1.xpose.msra.mxu0 0.0
        %474 = vmatprep.subr.mxu0 0.0
        %475 = vmatpush1.xpose.msra.mxu0 0.0
        %476 = vmatprep.subr.mxu0 0.0
        %477 = vmatpush1.xpose.msra.mxu0 0.0
        %478 = vmatprep.subr.mxu0 0.0
        %479 = vmatpush1.xpose.msra.mxu0 0.0
        %480 = vmatprep.subr.mxu0 0.0
        %481 = vmatpush1.xpose.msra.mxu0 0.0
        %482 = vmatprep.subr.mxu0 0.0
        %483 = vmatpush1.xpose.msra.mxu0 0.0
        %484 = vmatprep.subr.mxu0 0.0
        %485 = vmatpush1.xpose.msra.mxu0 0.0
        %486 = vmatprep.subr.mxu0 0.0
        %487 = vmatpush1.xpose.msra.mxu0 0.0
        %488 = vmatprep.subr.mxu0 0.0
        %489 = vmatpush1.xpose.msra.mxu0 0.0
        %490 = vmatprep.subr.mxu0 0.0
        %491 = vmatpush1.xpose.msra.mxu0 0.0
        %492 = vmatprep.subr.mxu0 0.0
        %493 = vmatpush1.xpose.msra.mxu0 0.0
        %494 = vmatprep.subr.mxu0 0.0
        %495 = vmatpush1.xpose.msra.mxu0 0.0
        %496 = vmatprep.mubr.f32.mxu0 0.0
        %497 = vmatmul.mubr.f32.gmra.mrb[0].mxu0 %v427
        %v498 = vpop.f32.mrb[0].mxu0
        %v499 = vadd.f32 0.0, %v498
        %v500 = vpop.f32.mrb[0].mxu0
        %501 = vdwg.mxu0
        %v503 = vsel %vm425, %v412, 0
        %v506 = vsel %vm425, %v416, 0
        %508 = vmatprep.subr.mxu0 0.0
        %509 = vmatpush1.xpose.msra.mxu0 %v506
        %510 = vmatprep.subr.mxu0 0.0
        %511 = vmatpush1.xpose.msra.mxu0 0.0
        %512 = vmatprep.subr.mxu0 0.0
        %513 = vmatpush1.xpose.msra.mxu0 0.0
        %514 = vmatprep.subr.mxu0 0.0
        %515 = vmatpush1.xpose.msra.mxu0 0.0
        %516 = vmatprep.subr.mxu0 0.0
        %517 = vmatpush1.xpose.msra.mxu0 0.0
        %518 = vmatprep.subr.mxu0 0.0
        %519 = vmatpush1.xpose.msra.mxu0 0.0
        %520 = vmatprep.subr.mxu0 0.0
        %521 = vmatpush1.xpose.msra.mxu0 0.0
        %522 = vmatprep.subr.mxu0 0.0
        %523 = vmatpush1.xpose.msra.mxu0 0.0
        %524 = vmatprep.subr.mxu0 0.0
        %525 = vmatpush1.xpose.msra.mxu0 0.0
        %526 = vmatprep.subr.mxu0 0.0
        %527 = vmatpush1.xpose.msra.mxu0 0.0
        %528 = vmatprep.subr.mxu0 0.0
        %529 = vmatpush1.xpose.msra.mxu0 0.0
        %530 = vmatprep.subr.mxu0 0.0
        %531 = vmatpush1.xpose.msra.mxu0 0.0
        %532 = vmatprep.subr.mxu0 0.0
        %533 = vmatpush1.xpose.msra.mxu0 0.0
        %534 = vmatprep.subr.mxu0 0.0
        %535 = vmatpush1.xpose.msra.mxu0 0.0
        %536 = vmatprep.subr.mxu0 0.0
        %537 = vmatpush1.xpose.msra.mxu0 0.0
        %538 = vmatprep.subr.mxu0 0.0
        %539 = vmatpush1.xpose.msra.mxu0 0.0
        %540 = vmatprep.subr.mxu0 0.0
        %541 = vmatpush1.xpose.msra.mxu0 0.0
        %542 = vmatprep.subr.mxu0 0.0
        %543 = vmatpush1.xpose.msra.mxu0 0.0
        %544 = vmatprep.subr.mxu0 0.0
        %545 = vmatpush1.xpose.msra.mxu0 0.0
        %546 = vmatprep.subr.mxu0 0.0
        %547 = vmatpush1.xpose.msra.mxu0 0.0
        %548 = vmatprep.subr.mxu0 0.0
        %549 = vmatpush1.xpose.msra.mxu0 0.0
        %550 = vmatprep.subr.mxu0 0.0
        %551 = vmatpush1.xpose.msra.mxu0 0.0
        %552 = vmatprep.subr.mxu0 0.0
        %553 = vmatpush1.xpose.msra.mxu0 0.0
        %554 = vmatprep.subr.mxu0 0.0
        %555 = vmatpush1.xpose.msra.mxu0 0.0
        %556 = vmatprep.subr.mxu0 0.0
        %557 = vmatpush1.xpose.msra.mxu0 0.0
        %558 = vmatprep.subr.mxu0 0.0
        %559 = vmatpush1.xpose.msra.mxu0 0.0
        %560 = vmatprep.subr.mxu0 0.0
        %561 = vmatpush1.xpose.msra.mxu0 0.0
        %562 = vmatprep.subr.mxu0 0.0
        %563 = vmatpush1.xpose.msra.mxu0 0.0
        %564 = vmatprep.subr.mxu0 0.0
        %565 = vmatpush1.xpose.msra.mxu0 0.0
        %566 = vmatprep.subr.mxu0 0.0
        %567 = vmatpush1.xpose.msra.mxu0 0.0
        %568 = vmatprep.subr.mxu0 0.0
        %569 = vmatpush1.xpose.msra.mxu0 0.0
        %570 = vmatprep.subr.mxu0 0.0
        %571 = vmatpush1.xpose.msra.mxu0 0.0
        %572 = vmatprep.mubr.f32.mxu0 0.0
        %573 = vmatmul.mubr.f32.gmra.mrb[0].mxu0 %v503
        %v574 = vpop.f32.mrb[0].mxu0
        %v575 = vadd.f32 0.0, %v574
        %v576 = vpop.f32.mrb[0].mxu0
        %577 = vdwg.mxu0
        %v579 = vsel %vm425, %v413, 0
        %v582 = vsel %vm425, %v417, 0
        %584 = vmatprep.subr.mxu0 0.0
        %585 = vmatpush1.xpose.msra.mxu0 %v582
        %586 = vmatprep.subr.mxu0 0.0
        %587 = vmatpush1.xpose.msra.mxu0 0.0
        %588 = vmatprep.subr.mxu0 0.0
        %589 = vmatpush1.xpose.msra.mxu0 0.0
        %590 = vmatprep.subr.mxu0 0.0
        %591 = vmatpush1.xpose.msra.mxu0 0.0
        %592 = vmatprep.subr.mxu0 0.0
        %593 = vmatpush1.xpose.msra.mxu0 0.0
        %594 = vmatprep.subr.mxu0 0.0
        %595 = vmatpush1.xpose.msra.mxu0 0.0
        %596 = vmatprep.subr.mxu0 0.0
        %597 = vmatpush1.xpose.msra.mxu0 0.0
        %598 = vmatprep.subr.mxu0 0.0
        %599 = vmatpush1.xpose.msra.mxu0 0.0
        %600 = vmatprep.subr.mxu0 0.0
        %601 = vmatpush1.xpose.msra.mxu0 0.0
        %602 = vmatprep.subr.mxu0 0.0
        %603 = vmatpush1.xpose.msra.mxu0 0.0
        %604 = vmatprep.subr.mxu0 0.0
        %605 = vmatpush1.xpose.msra.mxu0 0.0
        %606 = vmatprep.subr.mxu0 0.0
        %607 = vmatpush1.xpose.msra.mxu0 0.0
        %608 = vmatprep.subr.mxu0 0.0
        %609 = vmatpush1.xpose.msra.mxu0 0.0
        %610 = vmatprep.subr.mxu0 0.0
        %611 = vmatpush1.xpose.msra.mxu0 0.0
        %612 = vmatprep.subr.mxu0 0.0
        %613 = vmatpush1.xpose.msra.mxu0 0.0
        %614 = vmatprep.subr.mxu0 0.0
        %615 = vmatpush1.xpose.msra.mxu0 0.0
        %616 = vmatprep.subr.mxu0 0.0
        %617 = vmatpush1.xpose.msra.mxu0 0.0
        %618 = vmatprep.subr.mxu0 0.0
        %619 = vmatpush1.xpose.msra.mxu0 0.0
        %620 = vmatprep.subr.mxu0 0.0
        %621 = vmatpush1.xpose.msra.mxu0 0.0
        %622 = vmatprep.subr.mxu0 0.0
        %623 = vmatpush1.xpose.msra.mxu0 0.0
        %624 = vmatprep.subr.mxu0 0.0
        %625 = vmatpush1.xpose.msra.mxu0 0.0
        %626 = vmatprep.subr.mxu0 0.0
        %627 = vmatpush1.xpose.msra.mxu0 0.0
        %628 = vmatprep.subr.mxu0 0.0
        %629 = vmatpush1.xpose.msra.mxu0 0.0
        %630 = vmatprep.subr.mxu0 0.0
        %631 = vmatpush1.xpose.msra.mxu0 0.0
        %632 = vmatprep.subr.mxu0 0.0
        %633 = vmatpush1.xpose.msra.mxu0 0.0
        %634 = vmatprep.subr.mxu0 0.0
        %635 = vmatpush1.xpose.msra.mxu0 0.0
        %636 = vmatprep.subr.mxu0 0.0
        %637 = vmatpush1.xpose.msra.mxu0 0.0
        %638 = vmatprep.subr.mxu0 0.0
        %639 = vmatpush1.xpose.msra.mxu0 0.0
        %640 = vmatprep.subr.mxu0 0.0
        %641 = vmatpush1.xpose.msra.mxu0 0.0
        %642 = vmatprep.subr.mxu0 0.0
        %643 = vmatpush1.xpose.msra.mxu0 0.0
        %644 = vmatprep.subr.mxu0 0.0
        %645 = vmatpush1.xpose.msra.mxu0 0.0
        %646 = vmatprep.subr.mxu0 0.0
        %647 = vmatpush1.xpose.msra.mxu0 0.0
        %648 = vmatprep.mubr.f32.mxu0 0.0
        %649 = vmatmul.mubr.f32.gmra.mrb[0].mxu0 %v579
        %v650 = vpop.f32.mrb[0].mxu0
        %v651 = vadd.f32 0.0, %v650
        %v652 = vpop.f32.mrb[0].mxu0
        %653 = vdwg.mxu0
        %v655 = vsel %vm425, %v414, 0
        %v658 = vsel %vm425, %v418, 0
        %660 = vmatprep.subr.mxu0 0.0
        %661 = vmatpush1.xpose.msra.mxu0 %v658
        %662 = vmatprep.subr.mxu0 0.0
        %663 = vmatpush1.xpose.msra.mxu0 0.0
        %664 = vmatprep.subr.mxu0 0.0
        %665 = vmatpush1.xpose.msra.mxu0 0.0
        %666 = vmatprep.subr.mxu0 0.0
        %667 = vmatpush1.xpose.msra.mxu0 0.0
        %668 = vmatprep.subr.mxu0 0.0
        %669 = vmatpush1.xpose.msra.mxu0 0.0
        %670 = vmatprep.subr.mxu0 0.0
        %671 = vmatpush1.xpose.msra.mxu0 0.0
        %672 = vmatprep.subr.mxu0 0.0
        %673 = vmatpush1.xpose.msra.mxu0 0.0
        %674 = vmatprep.subr.mxu0 0.0
        %675 = vmatpush1.xpose.msra.mxu0 0.0
        %676 = vmatprep.subr.mxu0 0.0
        %677 = vmatpush1.xpose.msra.mxu0 0.0
        %678 = vmatprep.subr.mxu0 0.0
        %679 = vmatpush1.xpose.msra.mxu0 0.0
        %680 = vmatprep.subr.mxu0 0.0
        %681 = vmatpush1.xpose.msra.mxu0 0.0
        %682 = vmatprep.subr.mxu0 0.0
        %683 = vmatpush1.xpose.msra.mxu0 0.0
        %684 = vmatprep.subr.mxu0 0.0
        %685 = vmatpush1.xpose.msra.mxu0 0.0
        %686 = vmatprep.subr.mxu0 0.0
        %687 = vmatpush1.xpose.msra.mxu0 0.0
        %688 = vmatprep.subr.mxu0 0.0
        %689 = vmatpush1.xpose.msra.mxu0 0.0
        %690 = vmatprep.subr.mxu0 0.0
        %691 = vmatpush1.xpose.msra.mxu0 0.0
        %692 = vmatprep.subr.mxu0 0.0
        %693 = vmatpush1.xpose.msra.mxu0 0.0
        %694 = vmatprep.subr.mxu0 0.0
        %695 = vmatpush1.xpose.msra.mxu0 0.0
        %696 = vmatprep.subr.mxu0 0.0
        %697 = vmatpush1.xpose.msra.mxu0 0.0
        %698 = vmatprep.subr.mxu0 0.0
        %699 = vmatpush1.xpose.msra.mxu0 0.0
        %700 = vmatprep.subr.mxu0 0.0
        %701 = vmatpush1.xpose.msra.mxu0 0.0
        %702 = vmatprep.subr.mxu0 0.0
        %703 = vmatpush1.xpose.msra.mxu0 0.0
        %704 = vmatprep.subr.mxu0 0.0
        %705 = vmatpush1.xpose.msra.mxu0 0.0
        %706 = vmatprep.subr.mxu0 0.0
        %707 = vmatpush1.xpose.msra.mxu0 0.0
        %708 = vmatprep.subr.mxu0 0.0
        %709 = vmatpush1.xpose.msra.mxu0 0.0
        %710 = vmatprep.subr.mxu0 0.0
        %711 = vmatpush1.xpose.msra.mxu0 0.0
        %712 = vmatprep.subr.mxu0 0.0
        %713 = vmatpush1.xpose.msra.mxu0 0.0
        %714 = vmatprep.subr.mxu0 0.0
        %715 = vmatpush1.xpose.msra.mxu0 0.0
        %716 = vmatprep.subr.mxu0 0.0
        %717 = vmatpush1.xpose.msra.mxu0 0.0
        %718 = vmatprep.subr.mxu0 0.0
        %719 = vmatpush1.xpose.msra.mxu0 0.0
        %720 = vmatprep.subr.mxu0 0.0
        %721 = vmatpush1.xpose.msra.mxu0 0.0
        %722 = vmatprep.subr.mxu0 0.0
        %723 = vmatpush1.xpose.msra.mxu0 0.0
        %724 = vmatprep.mubr.f32.mxu0 0.0
        %725 = vmatmul.mubr.f32.gmra.mrb[0].mxu0 %v655
        %v726 = vpop.f32.mrb[0].mxu0
        %v727 = vadd.f32 0.0, %v726
        %v728 = vpop.f32.mrb[0].mxu0
        %729 = vdwg.mxu0
        %v730 = vsel %vm424, 16843009, 0
        %v731 = vunpack.c.0.s8 %v730
        %vm732 = vcmp.ne.s32.totalorder %v731, 0
        %v733 = vsel %vm732, 1, 0
        %vm734 = vcmp.eq.s32.totalorder %v733, 1
        %v735 = vsel %vm734, -10000.0, %v499
        %v736 = vsel %vm734, -10000.0, %v575
        %v737 = vsel %vm734, -10000.0, %v651
        %v738 = vsel %vm734, -10000.0, %v727
        %v739 = vld [vmem:[#allocation2] sm:$0xff]
        %v740 = vld [vmem:[#allocation2 + $0x8] sm:$0xff]
        %v741 = vld [vmem:[#allocation2 + $0x10] sm:$0xff]
        %v742 = vld [vmem:[#allocation2 + $0x18] sm:$0xff]
        %vm743 = vcmask 64512
        %v744 = vsel %vm743, %v735, -inf
        %745 = vmax.xlane.f32.xlu0 %v744
        %v746 = vpop.xlane.xlu0 %745
        %v747 = vsel %vm743, %v736, -inf
        %748 = vmax.xlane.f32.xlu0 %v747
        %v749 = vpop.xlane.xlu0 %748
        %v750 = vsel %vm743, %v737, -inf
        %751 = vmax.xlane.f32.xlu0 %v750
        %v752 = vpop.xlane.xlu0 %751
        %v753 = vsel %vm743, %v738, -inf
        %754 = vmax.xlane.f32.xlu0 %v753
        %v755 = vpop.xlane.xlu0 %754
        %v756 = vmax.f32 %v739, %v746
        %v757 = vmax.f32 %v740, %v749
        %v758 = vmax.f32 %v741, %v752
        %v759 = vmax.f32 %v742, %v755
        %v760 = vsub.f32 %v739, %v756
        %v761 = vsub.f32 %v740, %v757
        %v762 = vsub.f32 %v741, %v758
        %v763 = vsub.f32 %v742, %v759
        %v764 = vmul.f32 %v760, 1.442695
        %v765 = vpow.pop %v764
        %v766 = vmul.f32 %v761, 1.442695
        %v767 = vpow.pop %v766
        %v768 = vmul.f32 %v762, 1.442695
        %v769 = vpow.pop %v768
        %v770 = vmul.f32 %v763, 1.442695
        %v771 = vpow.pop %v770
        %773 = vset.pattern.permute.xlu0 0
        %774 = vperm.xlu0 %773, %v756
        %v775 = vpop.permute.xlu0 %774
        %778 = vset.pattern.permute.xlu0 0
        %779 = vperm.xlu0 %778, %v757
        %v780 = vpop.permute.xlu0 %779
        %783 = vset.pattern.permute.xlu0 0
        %784 = vperm.xlu0 %783, %v758
        %v785 = vpop.permute.xlu0 %784
        %788 = vset.pattern.permute.xlu0 0
        %789 = vperm.xlu0 %788, %v759
        %v790 = vpop.permute.xlu0 %789
        %v792 = vsub.f32 %v735, %v775
        %v793 = vsub.f32 %v736, %v780
        %v794 = vsub.f32 %v737, %v785
        %v795 = vsub.f32 %v738, %v790
        %v796 = vmul.f32 %v792, 1.442695
        %v797 = vpow.pop %v796
        %v798 = vmul.f32 %v793, 1.442695
        %v799 = vpow.pop %v798
        %v800 = vmul.f32 %v794, 1.442695
        %v801 = vpow.pop %v800
        %v802 = vmul.f32 %v795, 1.442695
        %v803 = vpow.pop %v802
        %v804 = vld [vmem:[#allocation3] sm:$0xff]
        %v805 = vld [vmem:[#allocation3 + $0x8] sm:$0xff]
        %v806 = vld [vmem:[#allocation3 + $0x10] sm:$0xff]
        %v807 = vld [vmem:[#allocation3 + $0x18] sm:$0xff]
        %v808 = vmul.f32 %v765, %v804
        %v809 = vmul.f32 %v767, %v805
        %v810 = vmul.f32 %v769, %v806
        %v811 = vmul.f32 %v771, %v807
        %v812 = vsel %vm743, %v797, 0.0
        %813 = vadd.xlane.f32.xlu0 %v812
        %v814 = vpop.xlane.xlu0 %813
        %v815 = vsel %vm743, %v799, 0.0
        %816 = vadd.xlane.f32.xlu0 %v815
        %v817 = vpop.xlane.xlu0 %816
        %v818 = vsel %vm743, %v801, 0.0
        %819 = vadd.xlane.f32.xlu0 %v818
        %v820 = vpop.xlane.xlu0 %819
        %v821 = vsel %vm743, %v803, 0.0
        %822 = vadd.xlane.f32.xlu0 %v821
        %v823 = vpop.xlane.xlu0 %822
        %v824 = vadd.f32 %v808, %v814
        %v825 = vadd.f32 %v809, %v817
        %v826 = vadd.f32 %v810, %v820
        %v827 = vadd.f32 %v811, %v823
        %vm828 = vcmask 7168
        %829 = vst.msk [vmem:[#allocation3] sm:$0xff] %vm828, %v824
        %830 = vst.msk [vmem:[#allocation3 + $0x8] sm:$0xff] %vm828, %v825
        %831 = vst.msk [vmem:[#allocation3 + $0x10] sm:$0xff] %vm828, %v826
        %832 = vst.msk [vmem:[#allocation3 + $0x18] sm:$0xff] %vm828, %v827
        %v833 = vld [vmem:[#allocation4] sm:$0xff]
        %v834 = vld [vmem:[#allocation4 + $0x8] sm:$0xff]
        %v835 = vld [vmem:[#allocation4 + $0x10] sm:$0xff]
        %v836 = vld [vmem:[#allocation4 + $0x18] sm:$0xff]
        %838 = vset.pattern.permute.xlu0 0
        %839 = vperm.xlu0 %838, %v765
        %v840 = vpop.permute.xlu0 %839
        %843 = vset.pattern.permute.xlu0 0
        %844 = vperm.xlu0 %843, %v767
        %v845 = vpop.permute.xlu0 %844
        %848 = vset.pattern.permute.xlu0 0
        %849 = vperm.xlu0 %848, %v769
        %v850 = vpop.permute.xlu0 %849
        %853 = vset.pattern.permute.xlu0 0
        %854 = vperm.xlu0 %853, %v771
        %v855 = vpop.permute.xlu0 %854
        %v857 = vmul.f32 %v840, %v833
        %v858 = vmul.f32 %v845, %v834
        %v859 = vmul.f32 %v850, %v835
        %v860 = vmul.f32 %v855, %v836
        %v862 = vsel %vm743, %v797, 0
        %864 = vmatprep.subr.mxu0 0.0
        %865 = vmatpush1.msra.mxu0 %v419
        %866 = vmatprep.subr.mxu0 0.0
        %867 = vmatpush1.msra.mxu0 0.0
        %868 = vmatprep.subr.mxu0 0.0
        %869 = vmatpush1.msra.mxu0 0.0
        %870 = vmatprep.subr.mxu0 0.0
        %871 = vmatpush1.msra.mxu0 0.0
        %872 = vmatprep.subr.mxu0 0.0
        %873 = vmatpush1.msra.mxu0 0.0
        %874 = vmatprep.subr.mxu0 0.0
        %875 = vmatpush1.msra.mxu0 0.0
        %876 = vmatprep.subr.mxu0 0.0
        %877 = vmatpush1.msra.mxu0 0.0
        %878 = vmatprep.subr.mxu0 0.0
        %879 = vmatpush1.msra.mxu0 0.0
        %880 = vmatprep.subr.mxu0 0.0
        %881 = vmatpush1.msra.mxu0 0.0
        %882 = vmatprep.subr.mxu0 0.0
        %883 = vmatpush1.msra.mxu0 0.0
        %884 = vmatprep.subr.mxu0 0.0
        %885 = vmatpush1.msra.mxu0 0.0
        %886 = vmatprep.subr.mxu0 0.0
        %887 = vmatpush1.msra.mxu0 0.0
        %888 = vmatprep.subr.mxu0 0.0
        %889 = vmatpush1.msra.mxu0 0.0
        %890 = vmatprep.subr.mxu0 0.0
        %891 = vmatpush1.msra.mxu0 0.0
        %892 = vmatprep.subr.mxu0 0.0
        %893 = vmatpush1.msra.mxu0 0.0
        %894 = vmatprep.subr.mxu0 0.0
        %895 = vmatpush1.msra.mxu0 0.0
        %896 = vmatprep.subr.mxu0 0.0
        %897 = vmatpush1.msra.mxu0 0.0
        %898 = vmatprep.subr.mxu0 0.0
        %899 = vmatpush1.msra.mxu0 0.0
        %900 = vmatprep.subr.mxu0 0.0
        %901 = vmatpush1.msra.mxu0 0.0
        %902 = vmatprep.subr.mxu0 0.0
        %903 = vmatpush1.msra.mxu0 0.0
        %904 = vmatprep.subr.mxu0 0.0
        %905 = vmatpush1.msra.mxu0 0.0
        %906 = vmatprep.subr.mxu0 0.0
        %907 = vmatpush1.msra.mxu0 0.0
        %908 = vmatprep.subr.mxu0 0.0
        %909 = vmatpush1.msra.mxu0 0.0
        %910 = vmatprep.subr.mxu0 0.0
        %911 = vmatpush1.msra.mxu0 0.0
        %912 = vmatprep.subr.mxu0 0.0
        %913 = vmatpush1.msra.mxu0 0.0
        %914 = vmatprep.subr.mxu0 0.0
        %915 = vmatpush1.msra.mxu0 0.0
        %916 = vmatprep.subr.mxu0 0.0
        %917 = vmatpush1.msra.mxu0 0.0
        %918 = vmatprep.subr.mxu0 0.0
        %919 = vmatpush1.msra.mxu0 0.0
        %920 = vmatprep.subr.mxu0 0.0
        %921 = vmatpush1.msra.mxu0 0.0
        %922 = vmatprep.subr.mxu0 0.0
        %923 = vmatpush1.msra.mxu0 0.0
        %924 = vmatprep.subr.mxu0 0.0
        %925 = vmatpush1.msra.mxu0 0.0
        %926 = vmatprep.subr.mxu0 0.0
        %927 = vmatpush1.msra.mxu0 0.0
        %928 = vmatprep.mubr.f32.mxu0 0.0
        %929 = vmatmul.mubr.f32.gmra.mrb[0].mxu0 %v862
        %v930 = vpop.f32.mrb[0].mxu0
        %v931 = vadd.f32 0.0, %v930
        %v932 = vpop.f32.mrb[0].mxu0
        %933 = vdwg.mxu0
        %v935 = vsel %vm743, %v799, 0
        %937 = vmatprep.subr.mxu0 0.0
        %938 = vmatpush1.msra.mxu0 %v420
        %939 = vmatprep.subr.mxu0 0.0
        %940 = vmatpush1.msra.mxu0 0.0
        %941 = vmatprep.subr.mxu0 0.0
        %942 = vmatpush1.msra.mxu0 0.0
        %943 = vmatprep.subr.mxu0 0.0
        %944 = vmatpush1.msra.mxu0 0.0
        %945 = vmatprep.subr.mxu0 0.0
        %946 = vmatpush1.msra.mxu0 0.0
        %947 = vmatprep.subr.mxu0 0.0
        %948 = vmatpush1.msra.mxu0 0.0
        %949 = vmatprep.subr.mxu0 0.0
        %950 = vmatpush1.msra.mxu0 0.0
        %951 = vmatprep.subr.mxu0 0.0
        %952 = vmatpush1.msra.mxu0 0.0
        %953 = vmatprep.subr.mxu0 0.0
        %954 = vmatpush1.msra.mxu0 0.0
        %955 = vmatprep.subr.mxu0 0.0
        %956 = vmatpush1.msra.mxu0 0.0
        %957 = vmatprep.subr.mxu0 0.0
        %958 = vmatpush1.msra.mxu0 0.0
        %959 = vmatprep.subr.mxu0 0.0
        %960 = vmatpush1.msra.mxu0 0.0
        %961 = vmatprep.subr.mxu0 0.0
        %962 = vmatpush1.msra.mxu0 0.0
        %963 = vmatprep.subr.mxu0 0.0
        %964 = vmatpush1.msra.mxu0 0.0
        %965 = vmatprep.subr.mxu0 0.0
        %966 = vmatpush1.msra.mxu0 0.0
        %967 = vmatprep.subr.mxu0 0.0
        %968 = vmatpush1.msra.mxu0 0.0
        %969 = vmatprep.subr.mxu0 0.0
        %970 = vmatpush1.msra.mxu0 0.0
        %971 = vmatprep.subr.mxu0 0.0
        %972 = vmatpush1.msra.mxu0 0.0
        %973 = vmatprep.subr.mxu0 0.0
        %974 = vmatpush1.msra.mxu0 0.0
        %975 = vmatprep.subr.mxu0 0.0
        %976 = vmatpush1.msra.mxu0 0.0
        %977 = vmatprep.subr.mxu0 0.0
        %978 = vmatpush1.msra.mxu0 0.0
        %979 = vmatprep.subr.mxu0 0.0
        %980 = vmatpush1.msra.mxu0 0.0
        %981 = vmatprep.subr.mxu0 0.0
        %982 = vmatpush1.msra.mxu0 0.0
        %983 = vmatprep.subr.mxu0 0.0
        %984 = vmatpush1.msra.mxu0 0.0
        %985 = vmatprep.subr.mxu0 0.0
        %986 = vmatpush1.msra.mxu0 0.0
        %987 = vmatprep.subr.mxu0 0.0
        %988 = vmatpush1.msra.mxu0 0.0
        %989 = vmatprep.subr.mxu0 0.0
        %990 = vmatpush1.msra.mxu0 0.0
        %991 = vmatprep.subr.mxu0 0.0
        %992 = vmatpush1.msra.mxu0 0.0
        %993 = vmatprep.subr.mxu0 0.0
        %994 = vmatpush1.msra.mxu0 0.0
        %995 = vmatprep.subr.mxu0 0.0
        %996 = vmatpush1.msra.mxu0 0.0
        %997 = vmatprep.subr.mxu0 0.0
        %998 = vmatpush1.msra.mxu0 0.0
        %999 = vmatprep.subr.mxu0 0.0
        %1000 = vmatpush1.msra.mxu0 0.0
        %1001 = vmatprep.mubr.f32.mxu0 0.0
        %1002 = vmatmul.mubr.f32.gmra.mrb[0].mxu0 %v935
        %v1003 = vpop.f32.mrb[0].mxu0
        %v1004 = vadd.f32 0.0, %v1003
        %v1005 = vpop.f32.mrb[0].mxu0
        %1006 = vdwg.mxu0
        %v1008 = vsel %vm743, %v801, 0
        %1010 = vmatprep.subr.mxu0 0.0
        %1011 = vmatpush1.msra.mxu0 %v421
        %1012 = vmatprep.subr.mxu0 0.0
        %1013 = vmatpush1.msra.mxu0 0.0
        %1014 = vmatprep.subr.mxu0 0.0
        %1015 = vmatpush1.msra.mxu0 0.0
        %1016 = vmatprep.subr.mxu0 0.0
        %1017 = vmatpush1.msra.mxu0 0.0
        %1018 = vmatprep.subr.mxu0 0.0
        %1019 = vmatpush1.msra.mxu0 0.0
        %1020 = vmatprep.subr.mxu0 0.0
        %1021 = vmatpush1.msra.mxu0 0.0
        %1022 = vmatprep.subr.mxu0 0.0
        %1023 = vmatpush1.msra.mxu0 0.0
        %1024 = vmatprep.subr.mxu0 0.0
        %1025 = vmatpush1.msra.mxu0 0.0
        %1026 = vmatprep.subr.mxu0 0.0
        %1027 = vmatpush1.msra.mxu0 0.0
        %1028 = vmatprep.subr.mxu0 0.0
        %1029 = vmatpush1.msra.mxu0 0.0
        %1030 = vmatprep.subr.mxu0 0.0
        %1031 = vmatpush1.msra.mxu0 0.0
        %1032 = vmatprep.subr.mxu0 0.0
        %1033 = vmatpush1.msra.mxu0 0.0
        %1034 = vmatprep.subr.mxu0 0.0
        %1035 = vmatpush1.msra.mxu0 0.0
        %1036 = vmatprep.subr.mxu0 0.0
        %1037 = vmatpush1.msra.mxu0 0.0
        %1038 = vmatprep.subr.mxu0 0.0
        %1039 = vmatpush1.msra.mxu0 0.0
        %1040 = vmatprep.subr.mxu0 0.0
        %1041 = vmatpush1.msra.mxu0 0.0
        %1042 = vmatprep.subr.mxu0 0.0
        %1043 = vmatpush1.msra.mxu0 0.0
        %1044 = vmatprep.subr.mxu0 0.0
        %1045 = vmatpush1.msra.mxu0 0.0
        %1046 = vmatprep.subr.mxu0 0.0
        %1047 = vmatpush1.msra.mxu0 0.0
        %1048 = vmatprep.subr.mxu0 0.0
        %1049 = vmatpush1.msra.mxu0 0.0
        %1050 = vmatprep.subr.mxu0 0.0
        %1051 = vmatpush1.msra.mxu0 0.0
        %1052 = vmatprep.subr.mxu0 0.0
        %1053 = vmatpush1.msra.mxu0 0.0
        %1054 = vmatprep.subr.mxu0 0.0
        %1055 = vmatpush1.msra.mxu0 0.0
        %1056 = vmatprep.subr.mxu0 0.0
        %1057 = vmatpush1.msra.mxu0 0.0
        %1058 = vmatprep.subr.mxu0 0.0
        %1059 = vmatpush1.msra.mxu0 0.0
        %1060 = vmatprep.subr.mxu0 0.0
        %1061 = vmatpush1.msra.mxu0 0.0
        %1062 = vmatprep.subr.mxu0 0.0
        %1063 = vmatpush1.msra.mxu0 0.0
        %1064 = vmatprep.subr.mxu0 0.0
        %1065 = vmatpush1.msra.mxu0 0.0
        %1066 = vmatprep.subr.mxu0 0.0
        %1067 = vmatpush1.msra.mxu0 0.0
        %1068 = vmatprep.subr.mxu0 0.0
        %1069 = vmatpush1.msra.mxu0 0.0
        %1070 = vmatprep.subr.mxu0 0.0
        %1071 = vmatpush1.msra.mxu0 0.0
        %1072 = vmatprep.subr.mxu0 0.0
        %1073 = vmatpush1.msra.mxu0 0.0
        %1074 = vmatprep.mubr.f32.mxu0 0.0
        %1075 = vmatmul.mubr.f32.gmra.mrb[0].mxu0 %v1008
        %v1076 = vpop.f32.mrb[0].mxu0
        %v1077 = vadd.f32 0.0, %v1076
        %v1078 = vpop.f32.mrb[0].mxu0
        %1079 = vdwg.mxu0
        %v1081 = vsel %vm743, %v803, 0
        %1083 = vmatprep.subr.mxu0 0.0
        %1084 = vmatpush1.msra.mxu0 %v422
        %1085 = vmatprep.subr.mxu0 0.0
        %1086 = vmatpush1.msra.mxu0 0.0
        %1087 = vmatprep.subr.mxu0 0.0
        %1088 = vmatpush1.msra.mxu0 0.0
        %1089 = vmatprep.subr.mxu0 0.0
        %1090 = vmatpush1.msra.mxu0 0.0
        %1091 = vmatprep.subr.mxu0 0.0
        %1092 = vmatpush1.msra.mxu0 0.0
        %1093 = vmatprep.subr.mxu0 0.0
        %1094 = vmatpush1.msra.mxu0 0.0
        %1095 = vmatprep.subr.mxu0 0.0
        %1096 = vmatpush1.msra.mxu0 0.0
        %1097 = vmatprep.subr.mxu0 0.0
        %1098 = vmatpush1.msra.mxu0 0.0
        %1099 = vmatprep.subr.mxu0 0.0
        %1100 = vmatpush1.msra.mxu0 0.0
        %1101 = vmatprep.subr.mxu0 0.0
        %1102 = vmatpush1.msra.mxu0 0.0
        %1103 = vmatprep.subr.mxu0 0.0
        %1104 = vmatpush1.msra.mxu0 0.0
        %1105 = vmatprep.subr.mxu0 0.0
        %1106 = vmatpush1.msra.mxu0 0.0
        %1107 = vmatprep.subr.mxu0 0.0
        %1108 = vmatpush1.msra.mxu0 0.0
        %1109 = vmatprep.subr.mxu0 0.0
        %1110 = vmatpush1.msra.mxu0 0.0
        %1111 = vmatprep.subr.mxu0 0.0
        %1112 = vmatpush1.msra.mxu0 0.0
        %1113 = vmatprep.subr.mxu0 0.0
        %1114 = vmatpush1.msra.mxu0 0.0
        %1115 = vmatprep.subr.mxu0 0.0
        %1116 = vmatpush1.msra.mxu0 0.0
        %1117 = vmatprep.subr.mxu0 0.0
        %1118 = vmatpush1.msra.mxu0 0.0
        %1119 = vmatprep.subr.mxu0 0.0
        %1120 = vmatpush1.msra.mxu0 0.0
        %1121 = vmatprep.subr.mxu0 0.0
        %1122 = vmatpush1.msra.mxu0 0.0
        %1123 = vmatprep.subr.mxu0 0.0
        %1124 = vmatpush1.msra.mxu0 0.0
        %1125 = vmatprep.subr.mxu0 0.0
        %1126 = vmatpush1.msra.mxu0 0.0
        %1127 = vmatprep.subr.mxu0 0.0
        %1128 = vmatpush1.msra.mxu0 0.0
        %1129 = vmatprep.subr.mxu0 0.0
        %1130 = vmatpush1.msra.mxu0 0.0
        %1131 = vmatprep.subr.mxu0 0.0
        %1132 = vmatpush1.msra.mxu0 0.0
        %1133 = vmatprep.subr.mxu0 0.0
        %1134 = vmatpush1.msra.mxu0 0.0
        %1135 = vmatprep.subr.mxu0 0.0
        %1136 = vmatpush1.msra.mxu0 0.0
        %1137 = vmatprep.subr.mxu0 0.0
        %1138 = vmatpush1.msra.mxu0 0.0
        %1139 = vmatprep.subr.mxu0 0.0
        %1140 = vmatpush1.msra.mxu0 0.0
        %1141 = vmatprep.subr.mxu0 0.0
        %1142 = vmatpush1.msra.mxu0 0.0
        %1143 = vmatprep.subr.mxu0 0.0
        %1144 = vmatpush1.msra.mxu0 0.0
        %1145 = vmatprep.subr.mxu0 0.0
        %1146 = vmatpush1.msra.mxu0 0.0
        %1147 = vmatprep.mubr.f32.mxu0 0.0
        %1148 = vmatmul.mubr.f32.gmra.mrb[0].mxu0 %v1081
        %v1149 = vpop.f32.mrb[0].mxu0
        %v1150 = vadd.f32 0.0, %v1149
        %v1151 = vpop.f32.mrb[0].mxu0
        %1152 = vdwg.mxu0
        %v1153 = vadd.f32 %v857, %v931
        %v1154 = vadd.f32 %v858, %v1004
        %v1155 = vadd.f32 %v859, %v1077
        %v1156 = vadd.f32 %v860, %v1150
        %1157 = vst.msk [vmem:[#allocation4] sm:$0xff] %vm425, %v1153
        %1158 = vst.msk [vmem:[#allocation4 + $0x8] sm:$0xff] %vm425, %v1154
        %1159 = vst.msk [vmem:[#allocation4 + $0x10] sm:$0xff] %vm425, %v1155
        %1160 = vst.msk [vmem:[#allocation4 + $0x18] sm:$0xff] %vm425, %v1156
        %1161 = vst.msk [vmem:[#allocation2] sm:$0xff] %vm828, %v756
        %1162 = vst.msk [vmem:[#allocation2 + $0x8] sm:$0xff] %vm828, %v757
        %1163 = vst.msk [vmem:[#allocation2 + $0x10] sm:$0xff] %vm828, %v758
        %1164 = vst.msk [vmem:[#allocation2 + $0x18] sm:$0xff] %vm828, %v759
        // Predicated region
        $region53: #{tpu_custom_call.1} parent=35 // pred_check
          %p1165 = pneg %p389
        $region54: #{tpu_custom_call.1} parent=35 // pred_check_branch
          %1167 = sbr.rel (%p1165) target = $region56
        $region55: #{tpu_custom_call.1} parent=35 // pred_region
          %v1168 = vld [vmem:[#allocation3] sm:$0xff]
          %v1169 = vld [vmem:[#allocation3 + $0x8] sm:$0xff]
          %v1170 = vld [vmem:[#allocation3 + $0x10] sm:$0xff]
          %v1171 = vld [vmem:[#allocation3 + $0x18] sm:$0xff]
          %v1172 = vrcp.pop %v1168
          %v1173 = vrcp.pop %v1169
          %v1174 = vrcp.pop %v1170
          %v1175 = vrcp.pop %v1171
          %v1176 = vld [vmem:[#allocation4] sm:$0xff]
          %v1177 = vld [vmem:[#allocation4 + $0x8] sm:$0xff]
          %v1178 = vld [vmem:[#allocation4 + $0x10] sm:$0xff]
          %v1179 = vld [vmem:[#allocation4 + $0x18] sm:$0xff]
          %1181 = vset.pattern.permute.xlu0 0
          %1182 = vperm.xlu0 %1181, %v1172
          %v1183 = vpop.permute.xlu0 %1182
          %1186 = vset.pattern.permute.xlu0 0
          %1187 = vperm.xlu0 %1186, %v1173
          %v1188 = vpop.permute.xlu0 %1187
          %1191 = vset.pattern.permute.xlu0 0
          %1192 = vperm.xlu0 %1191, %v1174
          %v1193 = vpop.permute.xlu0 %1192
          %1196 = vset.pattern.permute.xlu0 0
          %1197 = vperm.xlu0 %1196, %v1175
          %v1198 = vpop.permute.xlu0 %1197
          %v1200 = vmul.f32 %v1176, %v1183
          %v1201 = vmul.f32 %v1177, %v1188
          %v1202 = vmul.f32 %v1178, %v1193
          %v1203 = vmul.f32 %v1179, %v1198
          %1204 = vst.msk [vmem:[%s372] sm:$0xff] %vm425, %v1200
          %1205 = vst.msk [vmem:[%s372 + $0x8] sm:$0xff] %vm425, %v1201
          %1206 = vst.msk [vmem:[%s372 + $0x10] sm:$0xff] %vm425, %v1202
          %1207 = vst.msk [vmem:[%s372 + $0x18] sm:$0xff] %vm425, %v1203
        $region56: #{tpu_custom_call.1} parent=35 // pred_fallthru
          _
        %s1208 = sand.u32 %s182, 1
        %s1209 = scalar_lea.sflag [#allocation7], %s1208
        %s1210 = sand.u32 %s182, 1
        %s1211 = smul.addr %s1210, 32
        %s1212 = scalar_lea.vmem [#allocation11], %s1211
        // Predicated region
        $region57: #{tpu_custom_call.1} parent=35 // pred_check
          %p1213 = pneg %p192
        $region58: #{tpu_custom_call.1} parent=35 // pred_check_branch
          %1215 = sbr.rel (%p1213) target = $region60
        $region59: #{tpu_custom_call.1} parent=35 // pred_region
          %s1216 = smul.u32 4, %s31
          %s1218 = ssub.s32 512, 512
          %1219 = vsyncadd %s1209, %s1218
          %s1220 = sadd.s32 %s32, %s1216
          %s1221 = smul.addr %s30, 4
          %s1222 = sadd.s32 %s1220, %s1221
          %s1223 = smul.addr %s1222, 128
          %s1224 = scalar_lea.hbm %s4, %s1223
          %s1225 = sshll.u32 %s1212, 4
          %s1226 = int_to_ptr.vmem [resolvable:$true] %s1225
          %1231 = dma.vmem_to_hbm [thread:$0]  %s1226, 512, %s1224, %s1209, 128, 128, 8
        $region60: #{tpu_custom_call.1} parent=35 // pred_fallthru
          _
      $region36: #{tpu_custom_call.1} parent=5 // pred_fallthru
        _
      %p1232 = scmp.le.s32.totalorder 2, %s19
      // Predicated region
      $region61: #{tpu_custom_call.1} parent=5 // pred_check
        %p1233 = pneg %p1232
      $region62: #{tpu_custom_call.1} parent=5 // pred_check_branch
        %1235 = sbr.rel (%p1233) target = $region64
      $region63: #{tpu_custom_call.1} parent=5 // pred_region
        %s1236 = ssub.s32 %s19, 2
        // Predicated region
        $region65: #{tpu_custom_call.1} parent=63 // pred_check
          %p1237 = pneg %p198
        $region66: #{tpu_custom_call.1} parent=63 // pred_check_branch
          %1239 = sbr.rel (%p1237) target = $region68
        $region67: #{tpu_custom_call.1} parent=63 // pred_region
          %s1240 = sand.u32 %s183, 1
          %s1241 = scalar_lea.sflag [#allocation7], %s1240
          %s1242 = sand.u32 %s183, 1
          %s1243 = smul.addr %s1242, 32
          %s1244 = scalar_lea.vmem [#allocation11], %s1243
          %1245 = dma.done %s1241, 512
        $region68: #{tpu_custom_call.1} parent=63 // pred_fallthru
          _
      $region64: #{tpu_custom_call.1} parent=5 // pred_fallthru
        _
    $region6: #{tpu_custom_call.1} parent=1 // loop_footer
      %s23 = sadd.s32 1, %s19
    $region7: #{tpu_custom_call.1} parent=1 // loop_footer_branch
      %18 = sbr.rel target = $region3
    $region8: #{tpu_custom_call.1} parent=1 // loop_exit
      _
    %1246 = vsyncpa [#allocation6], 1
    %s1247 = scalar_lea.sflag [#allocation6], 1
    %1248 = vsyncpa %s1247, 1
    %1249 = vsyncpa [#allocation9], 1
    %s1250 = scalar_lea.sflag [#allocation9], 1
    %1251 = vsyncpa %s1250, 1
    %1252 = vsyncpa [#allocation7], 1
    %s1253 = scalar_lea.sflag [#allocation7], 1
    %1254 = vsyncpa %s1253, 1

</llo_original>
